<compile_context>
chip_gen: v7x
topology: tpu7x:2x2x1
jax: 0.10.0
libtpu: 0.0.40
codegen_flags: <defaults>
</compile_context>

<pallas_src>
import functools

import jax
import jax.numpy as jnp
from jax.experimental import pallas as pl
from jax.experimental.pallas import tpu as pltpu

LANE = 128


def linear_kernel(x_ref, w_ref, b_ref, o_ref):
    # y = x @ W + b ; MXU matmul with f32 accumulation, bias add in f32.
    acc = jnp.dot(x_ref[...], w_ref[...], preferred_element_type=jnp.float32)
    o_ref[...] = (acc + b_ref[...]).astype(o_ref.dtype)


def prepare_params(weight, bias, compute_dtype=jnp.bfloat16):
    """One-time parameter prep (do NOT call per forward).

    weight: (num_classes, input_size) PyTorch layout
    bias:   (num_classes,)
    Returns W^T zero-padded to (input_size, 128*k) in compute_dtype and bias
    zero-padded to (1, 128*k) in f32.
    """
    C, D = weight.shape
    Cp = pl.cdiv(C, LANE) * LANE
    w_t = jnp.zeros((D, Cp), dtype=compute_dtype)
    w_t = w_t.at[:, :C].set(weight.T.astype(compute_dtype))
    b2d = jnp.zeros((1, Cp), dtype=jnp.float32)
    b2d = b2d.at[:, :C].set(bias.astype(jnp.float32))
    return w_t, b2d


@functools.partial(jax.jit, static_argnames=("num_classes", "tb"))
def logistic_regression_forward(x, w_padded, b_padded, *, num_classes, tb=2048):
    """y = x @ W^T + b, returns (B, num_classes) float32."""
    B, D = x.shape
    Cp = w_padded.shape[1]

    # Batch tile: multiple of 8 (sublanes), capped at `tb` so double-buffered
    # x tiles + resident W + output tiles fit well under v7x's VMEM budget.
    tb = min(tb, pl.cdiv(B, 8) * 8)
    Bp = pl.cdiv(B, tb) * tb

    xc = x.astype(w_padded.dtype)
    if Bp != B:
        xc = jnp.pad(xc, ((0, Bp - B), (0, 0)))

    out = pl.pallas_call(
        linear_kernel,
        out_shape=jax.ShapeDtypeStruct((Bp, Cp), jnp.float32),
        grid_spec=pl.GridSpec(
            grid=(Bp // tb,),
            in_specs=[
                pl.BlockSpec((tb, D), lambda i: (i, 0)),   # streamed x tiles
                pl.BlockSpec((D, Cp), lambda i: (0, 0)),   # resident weights
                pl.BlockSpec((1, Cp), lambda i: (0, 0)),   # resident bias
            ],
            out_specs=pl.BlockSpec((tb, Cp), lambda i: (i, 0)),
        ),
        compiler_params=pltpu.CompilerParams(
            # Batch tiles are independent -> shard across TCs on v7x.
            dimension_semantics=("parallel",)),
    )(xc, w_padded, b_padded)

    return out[:B, :num_classes]


if __name__ == "__main__":
    input_size = 784
    num_classes = 10
    batch = 8

    key = jax.random.PRNGKey(0)
    kx, kw, kb = jax.random.split(key, 3)

    # Deterministic synthetic parameters (nn.Linear-like uniform init).
    bound = 1.0 / (input_size ** 0.5)
    weight = jax.random.uniform(kw, (num_classes, input_size),
                                minval=-bound, maxval=bound, dtype=jnp.float32)
    bias = jax.random.uniform(kb, (num_classes,),
                              minval=-bound, maxval=bound, dtype=jnp.float32)

    # Input: flattened Fashion-MNIST-like images, (B, 784).
    x = jax.random.normal(kx, (batch, input_size), dtype=jnp.float32)

    # One-time parameter prep (transpose + pad + bf16 cast), then jitted forward.
    w_padded, b_padded = prepare_params(weight, bias)
    out = logistic_regression_forward(x, w_padded, b_padded,
                                      num_classes=num_classes)
    out = jax.block_until_ready(out)

    assert out.shape == (batch, num_classes)

    # Reference with the same bf16 input quantization (tight tolerance)...
    ref_bf16 = (x.astype(jnp.bfloat16).astype(jnp.float32)
                @ weight.T.astype(jnp.bfloat16).astype(jnp.float32) + bias)
    assert jnp.allclose(out, ref_bf16, atol=1e-3, rtol=1e-3)
    # ...and the full-f32 reference at bf16-level tolerance.
    ref_f32 = x @ weight.T + bias
    assert jnp.allclose(out, ref_f32, atol=2e-2, rtol=2e-2)

    print("KERNEL_OK")
</pallas_src>

<mosaic_0001>
module attributes {stable_mosaic.version = 11 : i64} {
  func.func @linear_kernel(%arg0: i32, %arg1: memref<8x784xbf16, #tpu.memory_space<vmem>>, %arg2: memref<784x128xbf16, #tpu.memory_space<vmem>>, %arg3: memref<1x128xf32, #tpu.memory_space<vmem>>, %arg4: memref<8x128xf32, #tpu.memory_space<vmem>>) attributes {dimension_semantics = [#tpu.dimension_semantics<parallel>], iteration_bounds = array<i64: 1>, scalar_prefetch = 0 : i64, scratch_operands = 0 : i64, tpu.core_type = #tpu.core_type<tc>, window_params = [{transform_indices = @transform_0, window_bounds = array<i64: 8, 784>}, {pipeline_mode = #tpu.pipeline_mode<synchronous>, transform_indices = @transform_1, window_bounds = array<i64: 784, 128>}, {pipeline_mode = #tpu.pipeline_mode<synchronous>, transform_indices = @transform_2, window_bounds = array<i64: 1, 128>}, {transform_indices = @transform_3, window_bounds = array<i64: 8, 128>}]} {
    %c0 = arith.constant 0 : index
    %c0_0 = arith.constant 0 : index
    %0 = vector.load %arg1[%c0, %c0_0] : memref<8x784xbf16, #tpu.memory_space<vmem>>, vector<8x784xbf16>
    %c0_1 = arith.constant 0 : index
    %c0_2 = arith.constant 0 : index
    %1 = vector.load %arg2[%c0_1, %c0_2] : memref<784x128xbf16, #tpu.memory_space<vmem>>, vector<784x128xbf16>
    %cst = arith.constant dense<0.000000e+00> : vector<8x128xf32>
    %2 = tpu.matmul %0, %1, %cst {dimension_numbers = #tpu.dot_dimension_numbers<[1], [0], [0], [1], [0, 0, 1, 1], [], []>} : vector<8x784xbf16>, vector<784x128xbf16>, vector<8x128xf32> -> vector<8x128xf32>
    %c0_3 = arith.constant 0 : index
    %c0_4 = arith.constant 0 : index
    %3 = vector.load %arg3[%c0_3, %c0_4] : memref<1x128xf32, #tpu.memory_space<vmem>>, vector<1x128xf32>
    %4 = vector.broadcast %3 : vector<1x128xf32> to vector<8x128xf32>
    %5 = arith.addf %2, %4 : vector<8x128xf32>
    %c0_5 = arith.constant 0 : index
    %c0_6 = arith.constant 0 : index
    %6 = vector.load %arg4[%c0_5, %c0_6] : memref<8x128xf32, #tpu.memory_space<vmem>>, vector<8x128xf32>
    tpu.vector_store %arg4[%c0_5, %c0_6], %5 {strides = array<i32>} : memref<8x128xf32, #tpu.memory_space<vmem>>, vector<8x128xf32>,
    return
  }
  func.func @transform_0(%arg0: i32) -> (i32, i32) {
    %c0_i32 = arith.constant 0 : i32
    %c0_i32_0 = arith.constant 0 : i32
    return %arg0, %c0_i32 : i32, i32
  }
  func.func @transform_1(%arg0: i32) -> (i32, i32) {
    %c0_i32 = arith.constant 0 : i32
    %c0_i32_0 = arith.constant 0 : i32
    %c0_i32_1 = arith.constant 0 : i32
    return %c0_i32, %c0_i32_0 : i32, i32
  }
  func.func @transform_2(%arg0: i32) -> (i32, i32) {
    %c0_i32 = arith.constant 0 : i32
    %c0_i32_0 = arith.constant 0 : i32
    %c0_i32_1 = arith.constant 0 : i32
    return %c0_i32, %c0_i32_0 : i32, i32
  }
  func.func @transform_3(%arg0: i32) -> (i32, i32) {
    %c0_i32 = arith.constant 0 : i32
    %c0_i32_0 = arith.constant 0 : i32
    return %arg0, %c0_i32 : i32, i32
  }
}

</mosaic_0001>

<llo_original>
// kernel: logistic_regression_forward.1
$region0: #{logistic_regression_forward.1}
  #allocation0 [shape = 'u32[]', space=smem, size = 0x4, offset = 0x4, fixed_abs, tag = 'smem constant byte address 0x4 - core index']
  #allocation1 [shape = 'u32[144,128]{1,0:T(1,128)}', space=vmem, size = 0x12000, scoped, tag = 'internal scratch']
  %s0 = inlined_call_operand.vmem [shape: bf16[8,784], index: 0, kind: input, shape index: {}]
  %s1 = inlined_call_operand.hbm [shape: bf16[784,128], index: 1, kind: input, shape index: {}]
  %s2 = inlined_call_operand.vmem [shape: f32[1,128], index: 2, kind: input, shape index: {}]
  %s3 = inlined_call_operand.hbm [shape: f32[8,128], index: 3, kind: output, shape index: {}]
  %s4 = sld [smem:[#allocation0]]
  $region26: #{logistic_regression_forward.1} parent=0
    _
  %s6 = ssub.s32 1, %s4
  %s7 = scalar_select 0, %s6, %s4
  $region1: #{logistic_regression_forward.1} parent=0
    #allocation2 [shape = 'u8[200704]{0}', space=vmem, size = 0x31000, scoped, tag = 'input window, operand 1, single buffered']
    #allocation3 [shape = 's32[1]{0}', space=sflag, size = 0x4, scoped, tag = 'scoped memory for logistic_regression_forward.1']
    #allocation4 [shape = 's32[1]{0}', space=sflag, size = 0x4, scoped, tag = 'scoped memory for logistic_regression_forward.1']
    #allocation5 [shape = 'u8[4096]{0}', space=vmem, size = 0x1000, scoped, tag = 'output window, operand 0, single buffered']
    %8 = vsyncpa [#allocation3], 0
    %9 = vsyncpa [#allocation4], 0
    // Predicated region
    $region2: #{logistic_regression_forward.1} parent=1 // pred_check
      _
    $region3: #{logistic_regression_forward.1} parent=1 // pred_check_branch
      %11 = sbr.rel (0) target = $region5
    $region4: #{logistic_regression_forward.1} parent=1 // pred_region
      _
    $region5: #{logistic_regression_forward.1} parent=1 // pred_fallthru
      _
    // Predicated region
    $region6: #{logistic_regression_forward.1} parent=1 // pred_check
      _
    $region7: #{logistic_regression_forward.1} parent=1 // pred_check_branch
      %13 = sbr.rel (0) target = $region9
    $region8: #{logistic_regression_forward.1} parent=1 // pred_region
      %s15 = ssub.s32 6272, 6272
      %16 = vsyncadd [#allocation3], %s15
      %s17 = sshll.u32 [#allocation2], 4
      %s18 = int_to_ptr.vmem [resolvable:$true] %s17
      %23 = dma.hbm_to_vmem [thread:$0]  %s1, 6272, %s18, [#allocation3], 64, 64, 4
    $region9: #{logistic_regression_forward.1} parent=1 // pred_fallthru
      _
    // Predicated region
    $region10: #{logistic_regression_forward.1} parent=1 // pred_check
      _
    $region11: #{logistic_regression_forward.1} parent=1 // pred_check_branch
      %25 = sbr.rel (0) target = $region13
    $region12: #{logistic_regression_forward.1} parent=1 // pred_region
      _
    $region13: #{logistic_regression_forward.1} parent=1 // pred_fallthru
      _
    // Predicated region
    $region14: #{logistic_regression_forward.1} parent=1 // pred_check
      _
    $region15: #{logistic_regression_forward.1} parent=1 // pred_check_branch
      %27 = sbr.rel (0) target = $region17
    $region16: #{logistic_regression_forward.1} parent=1 // pred_region
      %28 = dma.done [#allocation3], 6272
    $region17: #{logistic_regression_forward.1} parent=1 // pred_fallthru
      _
    %v30 = vld [vmem:[%s0] sm:$0xff]
    %v31 = vld [vmem:[%s0 + $0x8] sm:$0xff]
    %v32 = vld [vmem:[%s0 + $0x10] sm:$0xff]
    %v33 = vld [vmem:[%s0 + $0x18] sm:$0xf]
    %v34 = vld [vmem:[#allocation2] sm:$0xf]
    %v35 = vld [vmem:[#allocation2 + $0x4] sm:$0xf]
    %v36 = vld [vmem:[#allocation2 + $0x8] sm:$0xf]
    %v37 = vld [vmem:[#allocation2 + $0xc] sm:$0xf]
    %v38 = vld [vmem:[#allocation2 + $0x10] sm:$0xf]
    %v39 = vld [vmem:[#allocation2 + $0x14] sm:$0xf]
    %v40 = vld [vmem:[#allocation2 + $0x18] sm:$0xf]
    %v41 = vld [vmem:[#allocation2 + $0x1c] sm:$0xf]
    %v42 = vld [vmem:[#allocation2 + $0x20] sm:$0xf]
    %v43 = vld [vmem:[#allocation2 + $0x24] sm:$0xf]
    %v44 = vld [vmem:[#allocation2 + $0x28] sm:$0xf]
    %v45 = vld [vmem:[#allocation2 + $0x2c] sm:$0xf]
    %v46 = vld [vmem:[#allocation2 + $0x30] sm:$0xf]
    %v47 = vld [vmem:[#allocation2 + $0x34] sm:$0xf]
    %v48 = vld [vmem:[#allocation2 + $0x38] sm:$0xf]
    %v49 = vld [vmem:[#allocation2 + $0x3c] sm:$0xf]
    %v50 = vld [vmem:[#allocation2 + $0x40] sm:$0xf]
    %v51 = vld [vmem:[#allocation2 + $0x44] sm:$0xf]
    %v52 = vld [vmem:[#allocation2 + $0x48] sm:$0xf]
    %v53 = vld [vmem:[#allocation2 + $0x4c] sm:$0xf]
    %v54 = vld [vmem:[#allocation2 + $0x50] sm:$0xf]
    %v55 = vld [vmem:[#allocation2 + $0x54] sm:$0xf]
    %v56 = vld [vmem:[#allocation2 + $0x58] sm:$0xf]
    %v57 = vld [vmem:[#allocation2 + $0x5c] sm:$0xf]
    %v58 = vld [vmem:[#allocation2 + $0x60] sm:$0xf]
    %v59 = vld [vmem:[#allocation2 + $0x64] sm:$0xf]
    %v60 = vld [vmem:[#allocation2 + $0x68] sm:$0xf]
    %v61 = vld [vmem:[#allocation2 + $0x6c] sm:$0xf]
    %v62 = vld [vmem:[#allocation2 + $0x70] sm:$0xf]
    %v63 = vld [vmem:[#allocation2 + $0x74] sm:$0xf]
    %v64 = vld [vmem:[#allocation2 + $0x78] sm:$0xf]
    %v65 = vld [vmem:[#allocation2 + $0x7c] sm:$0xf]
    %v66 = vld [vmem:[#allocation2 + $0x80] sm:$0xf]
    %v67 = vld [vmem:[#allocation2 + $0x84] sm:$0xf]
    %v68 = vld [vmem:[#allocation2 + $0x88] sm:$0xf]
    %v69 = vld [vmem:[#allocation2 + $0x8c] sm:$0xf]
    %v70 = vld [vmem:[#allocation2 + $0x90] sm:$0xf]
    %v71 = vld [vmem:[#allocation2 + $0x94] sm:$0xf]
    %v72 = vld [vmem:[#allocation2 + $0x98] sm:$0xf]
    %v73 = vld [vmem:[#allocation2 + $0x9c] sm:$0xf]
    %v74 = vld [vmem:[#allocation2 + $0xa0] sm:$0xf]
    %v75 = vld [vmem:[#allocation2 + $0xa4] sm:$0xf]
    %v76 = vld [vmem:[#allocation2 + $0xa8] sm:$0xf]
    %v77 = vld [vmem:[#allocation2 + $0xac] sm:$0xf]
    %v78 = vld [vmem:[#allocation2 + $0xb0] sm:$0xf]
    %v79 = vld [vmem:[#allocation2 + $0xb4] sm:$0xf]
    %v80 = vld [vmem:[#allocation2 + $0xb8] sm:$0xf]
    %v81 = vld [vmem:[#allocation2 + $0xbc] sm:$0xf]
    %v82 = vld [vmem:[#allocation2 + $0xc0] sm:$0xf]
    %v83 = vld [vmem:[#allocation2 + $0xc4] sm:$0xf]
    %v84 = vld [vmem:[#allocation2 + $0xc8] sm:$0xf]
    %v85 = vld [vmem:[#allocation2 + $0xcc] sm:$0xf]
    %v86 = vld [vmem:[#allocation2 + $0xd0] sm:$0xf]
    %v87 = vld [vmem:[#allocation2 + $0xd4] sm:$0xf]
    %v88 = vld [vmem:[#allocation2 + $0xd8] sm:$0xf]
    %v89 = vld [vmem:[#allocation2 + $0xdc] sm:$0xf]
    %v90 = vld [vmem:[#allocation2 + $0xe0] sm:$0xf]
    %v91 = vld [vmem:[#allocation2 + $0xe4] sm:$0xf]
    %v92 = vld [vmem:[#allocation2 + $0xe8] sm:$0xf]
    %v93 = vld [vmem:[#allocation2 + $0xec] sm:$0xf]
    %v94 = vld [vmem:[#allocation2 + $0xf0] sm:$0xf]
    %v95 = vld [vmem:[#allocation2 + $0xf4] sm:$0xf]
    %v96 = vld [vmem:[#allocation2 + $0xf8] sm:$0xf]
    %v97 = vld [vmem:[#allocation2 + $0xfc] sm:$0xf]
    %v98 = vld [vmem:[#allocation2 + $0x100] sm:$0xf]
    %v99 = vld [vmem:[#allocation2 + $0x104] sm:$0xf]
    %v100 = vld [vmem:[#allocation2 + $0x108] sm:$0xf]
    %v101 = vld [vmem:[#allocation2 + $0x10c] sm:$0xf]
    %v102 = vld [vmem:[#allocation2 + $0x110] sm:$0xf]
    %v103 = vld [vmem:[#allocation2 + $0x114] sm:$0xf]
    %v104 = vld [vmem:[#allocation2 + $0x118] sm:$0xf]
    %v105 = vld [vmem:[#allocation2 + $0x11c] sm:$0xf]
    %v106 = vld [vmem:[#allocation2 + $0x120] sm:$0xf]
    %v107 = vld [vmem:[#allocation2 + $0x124] sm:$0xf]
    %v108 = vld [vmem:[#allocation2 + $0x128] sm:$0xf]
    %v109 = vld [vmem:[#allocation2 + $0x12c] sm:$0xf]
    %v110 = vld [vmem:[#allocation2 + $0x130] sm:$0xf]
    %v111 = vld [vmem:[#allocation2 + $0x134] sm:$0xf]
    %v112 = vld [vmem:[#allocation2 + $0x138] sm:$0xf]
    %v113 = vld [vmem:[#allocation2 + $0x13c] sm:$0xf]
    %v114 = vld [vmem:[#allocation2 + $0x140] sm:$0xf]
    %v115 = vld [vmem:[#allocation2 + $0x144] sm:$0xf]
    %v116 = vld [vmem:[#allocation2 + $0x148] sm:$0xf]
    %v117 = vld [vmem:[#allocation2 + $0x14c] sm:$0xf]
    %v118 = vld [vmem:[#allocation2 + $0x150] sm:$0xf]
    %v119 = vld [vmem:[#allocation2 + $0x154] sm:$0xf]
    %v120 = vld [vmem:[#allocation2 + $0x158] sm:$0xf]
    %v121 = vld [vmem:[#allocation2 + $0x15c] sm:$0xf]
    %v122 = vld [vmem:[#allocation2 + $0x160] sm:$0xf]
    %v123 = vld [vmem:[#allocation2 + $0x164] sm:$0xf]
    %v124 = vld [vmem:[#allocation2 + $0x168] sm:$0xf]
    %v125 = vld [vmem:[#allocation2 + $0x16c] sm:$0xf]
    %v126 = vld [vmem:[#allocation2 + $0x170] sm:$0xf]
    %v127 = vld [vmem:[#allocation2 + $0x174] sm:$0xf]
    %v128 = vld [vmem:[#allocation2 + $0x178] sm:$0xf]
    %v129 = vld [vmem:[#allocation2 + $0x17c] sm:$0xf]
    %v130 = vld [vmem:[#allocation2 + $0x180] sm:$0xf]
    %v131 = vld [vmem:[#allocation2 + $0x184] sm:$0xf]
    %v132 = vld [vmem:[%s2] sm:$0x1]
    %v134 = vlaneseq
    %v135 = vshrl.u32 %v134, 7
    %v136 = vsub.s32 0, %v135
    %v137 = vrot.slane %v132, %v136
    %v143 = vunpack.c.l.b16 %v30
    %v144 = vunpack.c.h.b16 %v30
    %v145 = vunpack.c.l.b16 %v31
    %v146 = vunpack.c.h.b16 %v31
    %v147 = vunpack.c.l.b16 %v32
    %v148 = vunpack.c.h.b16 %v32
    %v149 = vunpack.c.l.b16 %v33
    %v150 = vpack.c.b16 %v143, %v143
    %v151 = vpack.c.b16 %v144, %v144
    %v152 = vpack.c.b16 %v145, %v145
    %v153 = vpack.c.b16 %v146, %v146
    %v154 = vpack.c.b16 %v147, %v147
    %v155 = vpack.c.b16 %v148, %v148
    %v156 = vpack.c.b16 %v149, %v149
    %v261 = vunpack.c.l.b16 %v34
    %v262 = vunpack.c.l.b16 %v35
    %v263 = vunpack.c.l.b16 %v36
    %v264 = vunpack.c.l.b16 %v37
    %v265 = vunpack.c.l.b16 %v38
    %v266 = vunpack.c.l.b16 %v39
    %v267 = vunpack.c.l.b16 %v40
    %v268 = vunpack.c.l.b16 %v41
    %v269 = vunpack.c.l.b16 %v42
    %v270 = vunpack.c.l.b16 %v43
    %v271 = vunpack.c.l.b16 %v44
    %v272 = vunpack.c.l.b16 %v45
    %v273 = vunpack.c.l.b16 %v46
    %v274 = vunpack.c.l.b16 %v47
    %v275 = vunpack.c.l.b16 %v48
    %v276 = vunpack.c.l.b16 %v49
    %v277 = vunpack.c.l.b16 %v50
    %v278 = vunpack.c.l.b16 %v51
    %v279 = vunpack.c.l.b16 %v52
    %v280 = vunpack.c.l.b16 %v53
    %v281 = vunpack.c.l.b16 %v54
    %v282 = vunpack.c.l.b16 %v55
    %v283 = vunpack.c.l.b16 %v56
    %v284 = vunpack.c.l.b16 %v57
    %v285 = vunpack.c.l.b16 %v58
    %v286 = vunpack.c.l.b16 %v59
    %v287 = vunpack.c.l.b16 %v60
    %v288 = vunpack.c.l.b16 %v61
    %v289 = vunpack.c.l.b16 %v62
    %v290 = vunpack.c.l.b16 %v63
    %v291 = vunpack.c.l.b16 %v64
    %v292 = vunpack.c.l.b16 %v65
    %v293 = vunpack.c.l.b16 %v66
    %v294 = vunpack.c.l.b16 %v67
    %v295 = vunpack.c.l.b16 %v68
    %v296 = vunpack.c.l.b16 %v69
    %v297 = vunpack.c.l.b16 %v70
    %v298 = vunpack.c.l.b16 %v71
    %v299 = vunpack.c.l.b16 %v72
    %v300 = vunpack.c.l.b16 %v73
    %v301 = vunpack.c.l.b16 %v74
    %v302 = vunpack.c.l.b16 %v75
    %v303 = vunpack.c.l.b16 %v76
    %v304 = vunpack.c.l.b16 %v77
    %v305 = vunpack.c.l.b16 %v78
    %v306 = vunpack.c.l.b16 %v79
    %v307 = vunpack.c.l.b16 %v80
    %v308 = vunpack.c.l.b16 %v81
    %v309 = vunpack.c.l.b16 %v82
    %v310 = vunpack.c.l.b16 %v83
    %v311 = vunpack.c.l.b16 %v84
    %v312 = vunpack.c.l.b16 %v85
    %v313 = vunpack.c.l.b16 %v86
    %v314 = vunpack.c.l.b16 %v87
    %v315 = vunpack.c.l.b16 %v88
    %v316 = vunpack.c.l.b16 %v89
    %v317 = vunpack.c.l.b16 %v90
    %v318 = vunpack.c.l.b16 %v91
    %v319 = vunpack.c.l.b16 %v92
    %v320 = vunpack.c.l.b16 %v93
    %v321 = vunpack.c.l.b16 %v94
    %v322 = vunpack.c.l.b16 %v95
    %v323 = vunpack.c.l.b16 %v96
    %v324 = vunpack.c.l.b16 %v97
    %v325 = vunpack.c.l.b16 %v98
    %v326 = vunpack.c.l.b16 %v99
    %v327 = vunpack.c.l.b16 %v100
    %v328 = vunpack.c.l.b16 %v101
    %v329 = vunpack.c.l.b16 %v102
    %v330 = vunpack.c.l.b16 %v103
    %v331 = vunpack.c.l.b16 %v104
    %v332 = vunpack.c.l.b16 %v105
    %v333 = vunpack.c.l.b16 %v106
    %v334 = vunpack.c.l.b16 %v107
    %v335 = vunpack.c.l.b16 %v108
    %v336 = vunpack.c.l.b16 %v109
    %v337 = vunpack.c.l.b16 %v110
    %v338 = vunpack.c.l.b16 %v111
    %v339 = vunpack.c.l.b16 %v112
    %v340 = vunpack.c.l.b16 %v113
    %v341 = vunpack.c.l.b16 %v114
    %v342 = vunpack.c.l.b16 %v115
    %v343 = vunpack.c.l.b16 %v116
    %v344 = vunpack.c.l.b16 %v117
    %v345 = vunpack.c.l.b16 %v118
    %v346 = vunpack.c.l.b16 %v119
    %v347 = vunpack.c.l.b16 %v120
    %v348 = vunpack.c.l.b16 %v121
    %v349 = vunpack.c.l.b16 %v122
    %v350 = vunpack.c.l.b16 %v123
    %v351 = vunpack.c.l.b16 %v124
    %v352 = vunpack.c.l.b16 %v125
    %v353 = vunpack.c.l.b16 %v126
    %v354 = vunpack.c.l.b16 %v127
    %v355 = vunpack.c.l.b16 %v128
    %v356 = vunpack.c.l.b16 %v129
    %v357 = vunpack.c.l.b16 %v130
    %v358 = vunpack.c.l.b16 %v131
    %v359 = vpack.c.b16 %v262, %v261
    %v360 = vpack.c.b16 %v264, %v263
    %v361 = vpack.c.b16 %v266, %v265
    %v362 = vpack.c.b16 %v268, %v267
    %v363 = vpack.c.b16 %v270, %v269
    %v364 = vpack.c.b16 %v272, %v271
    %v365 = vpack.c.b16 %v274, %v273
    %v366 = vpack.c.b16 %v276, %v275
    %v367 = vpack.c.b16 %v278, %v277
    %v368 = vpack.c.b16 %v280, %v279
    %v369 = vpack.c.b16 %v282, %v281
    %v370 = vpack.c.b16 %v284, %v283
    %v371 = vpack.c.b16 %v286, %v285
    %v372 = vpack.c.b16 %v288, %v287
    %v373 = vpack.c.b16 %v290, %v289
    %v374 = vpack.c.b16 %v292, %v291
    %v375 = vpack.c.b16 %v294, %v293
    %v376 = vpack.c.b16 %v296, %v295
    %v377 = vpack.c.b16 %v298, %v297
    %v378 = vpack.c.b16 %v300, %v299
    %v379 = vpack.c.b16 %v302, %v301
    %v380 = vpack.c.b16 %v304, %v303
    %v381 = vpack.c.b16 %v306, %v305
    %v382 = vpack.c.b16 %v308, %v307
    %v383 = vpack.c.b16 %v310, %v309
    %v384 = vpack.c.b16 %v312, %v311
    %v385 = vpack.c.b16 %v314, %v313
    %v386 = vpack.c.b16 %v316, %v315
    %v387 = vpack.c.b16 %v318, %v317
    %v388 = vpack.c.b16 %v320, %v319
    %v389 = vpack.c.b16 %v322, %v321
    %v390 = vpack.c.b16 %v324, %v323
    %v391 = vpack.c.b16 %v326, %v325
    %v392 = vpack.c.b16 %v328, %v327
    %v393 = vpack.c.b16 %v330, %v329
    %v394 = vpack.c.b16 %v332, %v331
    %v395 = vpack.c.b16 %v334, %v333
    %v396 = vpack.c.b16 %v336, %v335
    %v397 = vpack.c.b16 %v338, %v337
    %v398 = vpack.c.b16 %v340, %v339
    %v399 = vpack.c.b16 %v342, %v341
    %v400 = vpack.c.b16 %v344, %v343
    %v401 = vpack.c.b16 %v346, %v345
    %v402 = vpack.c.b16 %v348, %v347
    %v403 = vpack.c.b16 %v350, %v349
    %v404 = vpack.c.b16 %v352, %v351
    %v405 = vpack.c.b16 %v354, %v353
    %v406 = vpack.c.b16 %v356, %v355
    %v407 = vpack.c.b16 %v358, %v357
    %vm457 = vcmask 130048
    %v459 = vsel %vm457, %v156, 0
    %461 = vmatprep.subr.bf16.mxu0 0
    %462 = vmatpush1.bf16.msra.mxu0 %v359
    %463 = vmatprep.subr.bf16.mxu0 0
    %464 = vmatpush1.bf16.msra.mxu0 %v360
    %465 = vmatprep.subr.bf16.mxu0 0
    %466 = vmatpush1.bf16.msra.mxu0 %v361
    %467 = vmatprep.subr.bf16.mxu0 0
    %468 = vmatpush1.bf16.msra.mxu0 %v362
    %469 = vmatprep.subr.bf16.mxu0 0
    %470 = vmatpush1.bf16.msra.mxu0 %v363
    %471 = vmatprep.subr.bf16.mxu0 0
    %472 = vmatpush1.bf16.msra.mxu0 %v364
    %473 = vmatprep.subr.bf16.mxu0 0
    %474 = vmatpush1.bf16.msra.mxu0 %v365
    %475 = vmatprep.subr.bf16.mxu0 0
    %476 = vmatpush1.bf16.msra.mxu0 %v366
    %477 = vmatprep.subr.bf16.mxu0 0
    %478 = vmatpush1.bf16.msra.mxu0 %v367
    %479 = vmatprep.subr.bf16.mxu0 0
    %480 = vmatpush1.bf16.msra.mxu0 %v368
    %481 = vmatprep.subr.bf16.mxu0 0
    %482 = vmatpush1.bf16.msra.mxu0 %v369
    %483 = vmatprep.subr.bf16.mxu0 0
    %484 = vmatpush1.bf16.msra.mxu0 %v370
    %485 = vmatprep.subr.bf16.mxu0 0
    %486 = vmatpush1.bf16.msra.mxu0 %v371
    %487 = vmatprep.subr.bf16.mxu0 0
    %488 = vmatpush1.bf16.msra.mxu0 %v372
    %489 = vmatprep.subr.bf16.mxu0 0
    %490 = vmatpush1.bf16.msra.mxu0 %v373
    %491 = vmatprep.subr.bf16.mxu0 0
    %492 = vmatpush1.bf16.msra.mxu0 %v374
    %493 = vmatprep.mubr.bf16.mxu0 %v151
    %494 = vmatmul.mubr.bf16.gmra.mrb[0].mxu0 %v150
    %v495 = vpop.f32.mrb[0].mxu0
    %v496 = vadd.f32 %v137, %v495
    %v497 = vpop.f32.mrb[0].mxu0
    %v498 = vpop.f32.mrb[0].mxu0
    %v499 = vpop.f32.mrb[0].mxu0
    %500 = vdwg.mxu0
    %501 = vmatprep.subr.bf16.mxu0 0
    %502 = vmatpush1.bf16.msra.mxu0 %v375
    %503 = vmatprep.subr.bf16.mxu0 0
    %504 = vmatpush1.bf16.msra.mxu0 %v376
    %505 = vmatprep.subr.bf16.mxu0 0
    %506 = vmatpush1.bf16.msra.mxu0 %v377
    %507 = vmatprep.subr.bf16.mxu0 0
    %508 = vmatpush1.bf16.msra.mxu0 %v378
    %509 = vmatprep.subr.bf16.mxu0 0
    %510 = vmatpush1.bf16.msra.mxu0 %v379
    %511 = vmatprep.subr.bf16.mxu0 0
    %512 = vmatpush1.bf16.msra.mxu0 %v380
    %513 = vmatprep.subr.bf16.mxu0 0
    %514 = vmatpush1.bf16.msra.mxu0 %v381
    %515 = vmatprep.subr.bf16.mxu0 0
    %516 = vmatpush1.bf16.msra.mxu0 %v382
    %517 = vmatprep.subr.bf16.mxu0 0
    %518 = vmatpush1.bf16.msra.mxu0 %v383
    %519 = vmatprep.subr.bf16.mxu0 0
    %520 = vmatpush1.bf16.msra.mxu0 %v384
    %521 = vmatprep.subr.bf16.mxu0 0
    %522 = vmatpush1.bf16.msra.mxu0 %v385
    %523 = vmatprep.subr.bf16.mxu0 0
    %524 = vmatpush1.bf16.msra.mxu0 %v386
    %525 = vmatprep.subr.bf16.mxu0 0
    %526 = vmatpush1.bf16.msra.mxu0 %v387
    %527 = vmatprep.subr.bf16.mxu0 0
    %528 = vmatpush1.bf16.msra.mxu0 %v388
    %529 = vmatprep.subr.bf16.mxu0 0
    %530 = vmatpush1.bf16.msra.mxu0 %v389
    %531 = vmatprep.subr.bf16.mxu0 0
    %532 = vmatpush1.bf16.msra.mxu0 %v390
    %533 = vmatprep.mubr.bf16.mxu0 %v153
    %534 = vmatmul.mubr.bf16.gmra.mrb[0].mxu0 %v152
    %v535 = vpop.f32.mrb[0].mxu0
    %v536 = vadd.f32 %v496, %v535
    %v537 = vpop.f32.mrb[0].mxu0
    %v538 = vpop.f32.mrb[0].mxu0
    %v539 = vpop.f32.mrb[0].mxu0
    %540 = vdwg.mxu0
    %541 = vmatprep.subr.bf16.mxu0 0
    %542 = vmatpush1.bf16.msra.mxu0 %v391
    %543 = vmatprep.subr.bf16.mxu0 0
    %544 = vmatpush1.bf16.msra.mxu0 %v392
    %545 = vmatprep.subr.bf16.mxu0 0
    %546 = vmatpush1.bf16.msra.mxu0 %v393
    %547 = vmatprep.subr.bf16.mxu0 0
    %548 = vmatpush1.bf16.msra.mxu0 %v394
    %549 = vmatprep.subr.bf16.mxu0 0
    %550 = vmatpush1.bf16.msra.mxu0 %v395
    %551 = vmatprep.subr.bf16.mxu0 0
    %552 = vmatpush1.bf16.msra.mxu0 %v396
    %553 = vmatprep.subr.bf16.mxu0 0
    %554 = vmatpush1.bf16.msra.mxu0 %v397
    %555 = vmatprep.subr.bf16.mxu0 0
    %556 = vmatpush1.bf16.msra.mxu0 %v398
    %557 = vmatprep.subr.bf16.mxu0 0
    %558 = vmatpush1.bf16.msra.mxu0 %v399
    %559 = vmatprep.subr.bf16.mxu0 0
    %560 = vmatpush1.bf16.msra.mxu0 %v400
    %561 = vmatprep.subr.bf16.mxu0 0
    %562 = vmatpush1.bf16.msra.mxu0 %v401
    %563 = vmatprep.subr.bf16.mxu0 0
    %564 = vmatpush1.bf16.msra.mxu0 %v402
    %565 = vmatprep.subr.bf16.mxu0 0
    %566 = vmatpush1.bf16.msra.mxu0 %v403
    %567 = vmatprep.subr.bf16.mxu0 0
    %568 = vmatpush1.bf16.msra.mxu0 %v404
    %569 = vmatprep.subr.bf16.mxu0 0
    %570 = vmatpush1.bf16.msra.mxu0 %v405
    %571 = vmatprep.subr.bf16.mxu0 0
    %572 = vmatpush1.bf16.msra.mxu0 %v406
    %573 = vmatprep.mubr.bf16.mxu0 %v155
    %574 = vmatmul.mubr.bf16.gmra.mrb[0].mxu0 %v154
    %v575 = vpop.f32.mrb[0].mxu0
    %v576 = vadd.f32 %v536, %v575
    %v577 = vpop.f32.mrb[0].mxu0
    %v578 = vpop.f32.mrb[0].mxu0
    %v579 = vpop.f32.mrb[0].mxu0
    %580 = vdwg.mxu0
    %581 = vmatprep.subr.bf16.mxu0 0
    %582 = vmatpush1.bf16.msra.mxu0 %v407
    %583 = vmatprep.subr.bf16.mxu0 0
    %584 = vmatpush1.bf16.msra.mxu0 0
    %585 = vmatprep.subr.bf16.mxu0 0
    %586 = vmatpush1.bf16.msra.mxu0 0
    %587 = vmatprep.subr.bf16.mxu0 0
    %588 = vmatpush1.bf16.msra.mxu0 0
    %589 = vmatprep.subr.bf16.mxu0 0
    %590 = vmatpush1.bf16.msra.mxu0 0
    %591 = vmatprep.subr.bf16.mxu0 0
    %592 = vmatpush1.bf16.msra.mxu0 0
    %593 = vmatprep.subr.bf16.mxu0 0
    %594 = vmatpush1.bf16.msra.mxu0 0
    %595 = vmatprep.subr.bf16.mxu0 0
    %596 = vmatpush1.bf16.msra.mxu0 0
    %597 = vmatprep.subr.bf16.mxu0 0
    %598 = vmatpush1.bf16.msra.mxu0 0
    %599 = vmatprep.subr.bf16.mxu0 0
    %600 = vmatpush1.bf16.msra.mxu0 0
    %601 = vmatprep.subr.bf16.mxu0 0
    %602 = vmatpush1.bf16.msra.mxu0 0
    %603 = vmatprep.subr.bf16.mxu0 0
    %604 = vmatpush1.bf16.msra.mxu0 0
    %605 = vmatprep.subr.bf16.mxu0 0
    %606 = vmatpush1.bf16.msra.mxu0 0
    %607 = vmatprep.subr.bf16.mxu0 0
    %608 = vmatpush1.bf16.msra.mxu0 0
    %609 = vmatprep.subr.bf16.mxu0 0
    %610 = vmatpush1.bf16.msra.mxu0 0
    %611 = vmatprep.subr.bf16.mxu0 0
    %612 = vmatpush1.bf16.msra.mxu0 0
    %613 = vmatprep.mubr.bf16.mxu0 0
    %614 = vmatmul.mubr.bf16.gmra.mrb[0].mxu0 %v459
    %v615 = vpop.f32.mrb[0].mxu0
    %v616 = vadd.f32 %v576, %v615
    %v617 = vpop.f32.mrb[0].mxu0
    %v618 = vpop.f32.mrb[0].mxu0
    %v619 = vpop.f32.mrb[0].mxu0
    %620 = vdwg.mxu0
    %621 = vst [vmem:[#allocation5] sm:$0xff] %v616
    // Predicated region
    $region18: #{logistic_regression_forward.1} parent=1 // pred_check
      _
    $region19: #{logistic_regression_forward.1} parent=1 // pred_check_branch
      %623 = sbr.rel (0) target = $region21
    $region20: #{logistic_regression_forward.1} parent=1 // pred_region
      %s625 = ssub.s32 128, 128
      %626 = vsyncadd [#allocation4], %s625
      %s628 = sshll.u32 [#allocation5], 4
      %s629 = int_to_ptr.vmem [resolvable:$true] %s628
      %631 = dma.vmem_to_hbm [thread:$0]  %s629, 128, %s3, [#allocation4]
    $region21: #{logistic_regression_forward.1} parent=1 // pred_fallthru
      _
    // Predicated region
    $region22: #{logistic_regression_forward.1} parent=1 // pred_check
      _
    $region23: #{logistic_regression_forward.1} parent=1 // pred_check_branch
      %633 = sbr.rel (0) target = $region25
    $region24: #{logistic_regression_forward.1} parent=1 // pred_region
      %634 = dma.done [#allocation4], 128
    $region25: #{logistic_regression_forward.1} parent=1 // pred_fallthru
      _
    %635 = vsyncpa [#allocation3], 1
    %636 = vsyncpa [#allocation4], 1

</llo_original>
